<compile_context>
chip_gen: v6e
topology: v6e:2x2x1
jax: 0.10.0
libtpu: 0.0.40
codegen_flags: <defaults>
</compile_context>

<pallas_src>
import functools

import jax
import jax.numpy as jnp
from jax.experimental import pallas as pl
from jax.experimental.pallas import tpu as pltpu


def _round_up(x, m):
    return (x + m - 1) // m * m


def _simcat_kernel(x_ref, w_ref, b_ref, o_ref):
    """x:(TM,Kp)  w:(Kp,TN)  b:(1,TN) f32  o:(TM,TN).  One dot + f32 epilogue."""
    acc = jnp.dot(x_ref[...], w_ref[...], preferred_element_type=jnp.float32)
    o_ref[...] = jnp.maximum(acc + b_ref[...], 0.0).astype(o_ref.dtype)


def _vmem_capacity_bytes():
    """Physical VMEM of the attached part; conservative fallback = v7x per-TC."""
    try:
        cap = getattr(pltpu.get_tpu_info(), "vmem_capacity_bytes", None)
        if cap:
            return int(cap)
    except Exception:
        pass
    return 64 * 1024 * 1024


def _choose_tiles(m_rows, k_pad, n_pad, x_bytes, out_bytes, budget_bytes):
    """Pick (tm, tn): double-buffered x/out tiles + resident weight block."""
    bias_fp = 2 * n_pad * 4

    def fits(tm, tn):
        w_fp = 2 * k_pad * tn * x_bytes   # 2 buffers, but constant index -> resident
        x_fp = 2 * tm * k_pad * x_bytes
        o_fp = 2 * tm * tn * out_bytes
        return w_fp + x_fp + o_fp + bias_fp <= budget_bytes

    # Output-feature tile: full width when the weight block fits, else shrink.
    tn = n_pad
    while tn > 128 and not fits(8, tn):
        tn = max(128, _round_up(tn // 2, 128))
    # TODO(synk): if even tn=128 does not fit (enormous 2*n_in), add a K
    # reduction grid axis instead of relying on vmem_limit_bytes headroom.

    # Batch tile: largest multiple of 8 that fits the remaining budget.
    per_row = 2 * k_pad * x_bytes + 2 * tn * out_bytes
    fixed = 2 * k_pad * tn * x_bytes + bias_fp
    tm_max = max(8, (budget_bytes - fixed) // per_row)
    tm = max(8, min(2048, _round_up(m_rows, 8), (tm_max // 8) * 8))

    # Keep >=2 batch tiles so a dual-TensorCore part (v7x) can split the
    # "parallel" batch axis; costs at most one extra ~0.35us grid step.
    if m_rows >= 16:
        tm = min(tm, _round_up(-(-m_rows // 2), 8))
    return tm, tn


@functools.partial(jax.jit, static_argnames=("cast_operands_to_bf16",))
def simcat_forward(h, w, b, *, cast_operands_to_bf16=True):
    """h: (B, n_in), w: (2*n_in, n_in) (x @ w layout), b: (n_in,) -> (B//2, n_in)."""
    B, n_in = h.shape
    assert B % 2 == 0, "batch must be even (module splits it in half)"
    assert w.shape == (2 * n_in, n_in)
    M = B // 2

    # Feature-concat of the two batch halves (the PyTorch layout), built once
    # so the kernel needs a single resident-weight dot per tile.
    x = jnp.concatenate([h[:M], h[M:]], axis=1)              # (M, 2*n_in)

    k_pad = _round_up(2 * n_in, 128)                          # lane-dense K
    n_pad = _round_up(n_in, 128)                              # lane-dense N

    out_dtype = h.dtype
    op_dtype = jnp.bfloat16 if cast_operands_to_bf16 else h.dtype
    op_bytes = jnp.dtype(op_dtype).itemsize
    out_bytes = jnp.dtype(out_dtype).itemsize

    cap = _vmem_capacity_bytes()
    tm, tn = _choose_tiles(M, k_pad, n_pad, op_bytes, out_bytes, cap // 2)
    m_pad = _round_up(M, tm)
    n_pad = _round_up(n_pad, tn)

    # Zero-padding is skipped when already aligned; it is benign and sliced off.
    if x.shape != (m_pad, k_pad):
        x = jnp.pad(x, ((0, m_pad - M), (0, k_pad - 2 * n_in)))
    wp = w
    if wp.shape != (k_pad, n_pad):
        wp = jnp.pad(wp, ((0, k_pad - 2 * n_in), (0, n_pad - n_in)))
    bp = b.reshape(1, n_in)
    if n_pad != n_in:
        bp = jnp.pad(bp, ((0, 0), (0, n_pad - n_in)))
    bp = bp.astype(jnp.float32)          # epilogue stays f32 (v5e VPU has no bf16)

    if x.dtype != op_dtype:
        x = x.astype(op_dtype)
    if wp.dtype != op_dtype:
        wp = wp.astype(op_dtype)

    out = pl.pallas_call(
        _simcat_kernel,
        out_shape=jax.ShapeDtypeStruct((m_pad, n_pad), out_dtype),
        grid_spec=pltpu.PrefetchScalarGridSpec(
            num_scalar_prefetch=0,
            grid=(m_pad // tm, n_pad // tn),
            in_specs=[
                pl.BlockSpec((tm, k_pad), lambda i, j: (i, 0)),   # x tile (resident over j)
                pl.BlockSpec((k_pad, tn), lambda i, j: (0, j)),   # W block (resident over i)
                pl.BlockSpec((1, tn), lambda i, j: (0, j)),       # bias row
            ],
            out_specs=pl.BlockSpec((tm, tn), lambda i, j: (i, j)),
        ),
        compiler_params=pltpu.CompilerParams(
            dimension_semantics=("parallel", "parallel"),
            vmem_limit_bytes=int(cap * 3 // 4),
        ),
    )(x, wp, bp)

    return out[:M, :n_in]


def simcat_reference(h, w, b):
    """Pure-JAX reference matching the PyTorch module (f32 end to end)."""
    B = h.shape[0]
    x = jnp.concatenate([h[: B // 2], h[B // 2:]], axis=1)
    return jnp.maximum(
        jnp.dot(x, w, precision=jax.lax.Precision.HIGHEST) + b, 0.0)


if __name__ == "__main__":
    key = jax.random.PRNGKey(0)
    B, n_in = 8, 32   # even batch; after split/cat: (4, 64) -> Linear(64, 32)

    k_h, k_w, k_b = jax.random.split(key, 3)
    h = jax.random.normal(k_h, (B, n_in), dtype=jnp.float32)

    # Deterministic Linear init (PyTorch-style uniform in +/- 1/sqrt(fan_in)).
    fan_in = 2 * n_in
    bound = 1.0 / jnp.sqrt(jnp.float32(fan_in))
    w = jax.random.uniform(k_w, (2 * n_in, n_in), dtype=jnp.float32,
                           minval=-bound, maxval=bound)
    b = jax.random.uniform(k_b, (n_in,), dtype=jnp.float32,
                           minval=-bound, maxval=bound)

    out = jax.block_until_ready(simcat_forward(h, w, b))
    ref = simcat_reference(h, w, b)

    assert out.shape == (B // 2, n_in), out.shape
    # Kernel uses bf16 MXU operands with f32 accumulation; compare against the
    # full-f32 reference with a correspondingly loose tolerance.
    assert jnp.allclose(out, ref, atol=5e-2, rtol=5e-2), "mismatch vs reference"

    print("KERNEL_OK")
</pallas_src>

<mosaic_0001>
module attributes {stable_mosaic.version = 11 : i64} {
  func.func @_simcat_kernel(%arg0: i32, %arg1: i32, %arg2: memref<8x128xbf16, #tpu.memory_space<vmem>>, %arg3: memref<128x128xbf16, #tpu.memory_space<vmem>>, %arg4: memref<1x128xf32, #tpu.memory_space<vmem>>, %arg5: memref<8x128xf32, #tpu.memory_space<vmem>>) attributes {dimension_semantics = [#tpu.dimension_semantics<parallel>, #tpu.dimension_semantics<parallel>], iteration_bounds = array<i64: 1, 1>, scalar_prefetch = 0 : i64, scratch_operands = 0 : i64, tpu.core_type = #tpu.core_type<tc>, window_params = [{transform_indices = @transform_0, window_bounds = array<i64: 8, 128>}, {transform_indices = @transform_1, window_bounds = array<i64: 128, 128>}, {transform_indices = @transform_2, window_bounds = array<i64: 1, 128>}, {transform_indices = @transform_3, window_bounds = array<i64: 8, 128>}]} {
    %c0 = arith.constant 0 : index
    %c0_0 = arith.constant 0 : index
    %0 = vector.load %arg2[%c0, %c0_0] : memref<8x128xbf16, #tpu.memory_space<vmem>>, vector<8x128xbf16>
    %c0_1 = arith.constant 0 : index
    %c0_2 = arith.constant 0 : index
    %1 = vector.load %arg3[%c0_1, %c0_2] : memref<128x128xbf16, #tpu.memory_space<vmem>>, vector<128x128xbf16>
    %cst = arith.constant dense<0.000000e+00> : vector<8x128xf32>
    %2 = tpu.matmul %0, %1, %cst {dimension_numbers = #tpu.dot_dimension_numbers<[1], [0], [0], [1], [0, 0, 1, 1], [], []>} : vector<8x128xbf16>, vector<128x128xbf16>, vector<8x128xf32> -> vector<8x128xf32>
    %c0_3 = arith.constant 0 : index
    %c0_4 = arith.constant 0 : index
    %3 = vector.load %arg4[%c0_3, %c0_4] : memref<1x128xf32, #tpu.memory_space<vmem>>, vector<1x128xf32>
    %4 = vector.broadcast %3 : vector<1x128xf32> to vector<8x128xf32>
    %5 = arith.addf %2, %4 : vector<8x128xf32>
    %cst_5 = arith.constant 0.000000e+00 : f32
    %6 = vector.broadcast %cst_5 : f32 to vector<8x128xf32>
    %7 = arith.maximumf %5, %6 : vector<8x128xf32>
    %c0_6 = arith.constant 0 : index
    %c0_7 = arith.constant 0 : index
    %8 = vector.load %arg5[%c0_6, %c0_7] : memref<8x128xf32, #tpu.memory_space<vmem>>, vector<8x128xf32>
    tpu.vector_store %arg5[%c0_6, %c0_7], %7 {strides = array<i32>} : memref<8x128xf32, #tpu.memory_space<vmem>>, vector<8x128xf32>,
    return
  }
  func.func @transform_0(%arg0: i32, %arg1: i32) -> (i32, i32) {
    %c0_i32 = arith.constant 0 : i32
    %c0_i32_0 = arith.constant 0 : i32
    return %arg0, %c0_i32 : i32, i32
  }
  func.func @transform_1(%arg0: i32, %arg1: i32) -> (i32, i32) {
    %c0_i32 = arith.constant 0 : i32
    %c0_i32_0 = arith.constant 0 : i32
    return %c0_i32, %arg1 : i32, i32
  }
  func.func @transform_2(%arg0: i32, %arg1: i32) -> (i32, i32) {
    %c0_i32 = arith.constant 0 : i32
    %c0_i32_0 = arith.constant 0 : i32
    return %c0_i32, %arg1 : i32, i32
  }
  func.func @transform_3(%arg0: i32, %arg1: i32) -> (i32, i32) {
    %c0_i32 = arith.constant 0 : i32
    return %arg0, %arg1 : i32, i32
  }
}

</mosaic_0001>

<llo_original>
// kernel: simcat_forward.1
$region0: #{simcat_forward.1}
  #allocation0 [shape = 'u32[]', space=smem, size = 0x4, offset = 0x4, fixed_abs, tag = 'smem constant byte address 0x4 - core index']
  #allocation1 [shape = 'u32[144,128]{1,0:T(1,128)}', space=vmem, size = 0x12000, scoped, tag = 'internal scratch']
  %s0 = inlined_call_operand.vmem [shape: bf16[8,128], index: 0, kind: input, shape index: {}]
  %s1 = inlined_call_operand.vmem [shape: bf16[128,128], index: 1, kind: input, shape index: {}]
  %s2 = inlined_call_operand.vmem [shape: f32[1,128], index: 2, kind: input, shape index: {}]
  %s3 = inlined_call_operand.vmem [shape: f32[8,128], index: 3, kind: output, shape index: {}]
  %s4 = sld [smem:[#allocation0]]
  $region22: #{simcat_forward.1} parent=0
    _
  %s6 = ssub.s32 1, %s4
  %s7 = scalar_select 0, %s6, %s4
  // Predicated region
  $region2: #{simcat_forward.1} parent=0 // pred_check
    _
  $region3: #{simcat_forward.1} parent=0 // pred_check_branch
    %9 = sbr.rel (0) target = $region5
  $region4: #{simcat_forward.1} parent=0 // pred_region
    _
  $region5: #{simcat_forward.1} parent=0 // pred_fallthru
    _
  // Predicated region
  $region6: #{simcat_forward.1} parent=0 // pred_check
    _
  $region7: #{simcat_forward.1} parent=0 // pred_check_branch
    %11 = sbr.rel (0) target = $region9
  $region8: #{simcat_forward.1} parent=0 // pred_region
    _
  $region9: #{simcat_forward.1} parent=0 // pred_fallthru
    _
  // Predicated region
  $region10: #{simcat_forward.1} parent=0 // pred_check
    _
  $region11: #{simcat_forward.1} parent=0 // pred_check_branch
    %13 = sbr.rel (0) target = $region13
  $region12: #{simcat_forward.1} parent=0 // pred_region
    _
  $region13: #{simcat_forward.1} parent=0 // pred_fallthru
    _
  %v15 = vld [vmem:[%s0] sm:$0xf]
  %v16 = vld [vmem:[%s1] sm:$0xf]
  %v17 = vld [vmem:[%s1 + $0x4] sm:$0xf]
  %v18 = vld [vmem:[%s1 + $0x8] sm:$0xf]
  %v19 = vld [vmem:[%s1 + $0xc] sm:$0xf]
  %v20 = vld [vmem:[%s1 + $0x10] sm:$0xf]
  %v21 = vld [vmem:[%s1 + $0x14] sm:$0xf]
  %v22 = vld [vmem:[%s1 + $0x18] sm:$0xf]
  %v23 = vld [vmem:[%s1 + $0x1c] sm:$0xf]
  %v24 = vld [vmem:[%s1 + $0x20] sm:$0xf]
  %v25 = vld [vmem:[%s1 + $0x24] sm:$0xf]
  %v26 = vld [vmem:[%s1 + $0x28] sm:$0xf]
  %v27 = vld [vmem:[%s1 + $0x2c] sm:$0xf]
  %v28 = vld [vmem:[%s1 + $0x30] sm:$0xf]
  %v29 = vld [vmem:[%s1 + $0x34] sm:$0xf]
  %v30 = vld [vmem:[%s1 + $0x38] sm:$0xf]
  %v31 = vld [vmem:[%s1 + $0x3c] sm:$0xf]
  %v32 = vld [vmem:[%s2] sm:$0x1]
  %v34 = vlaneseq
  %v35 = vshrl.u32 %v34, 7
  %v36 = vsub.s32 0, %v35
  %v37 = vrot.slane %v32, %v36
  %v55 = vunpack.c.l.b16 %v16
  %v56 = vunpack.c.l.b16 %v17
  %v57 = vunpack.c.l.b16 %v18
  %v58 = vunpack.c.l.b16 %v19
  %v59 = vunpack.c.l.b16 %v20
  %v60 = vunpack.c.l.b16 %v21
  %v61 = vunpack.c.l.b16 %v22
  %v62 = vunpack.c.l.b16 %v23
  %v63 = vunpack.c.l.b16 %v24
  %v64 = vunpack.c.l.b16 %v25
  %v65 = vunpack.c.l.b16 %v26
  %v66 = vunpack.c.l.b16 %v27
  %v67 = vunpack.c.l.b16 %v28
  %v68 = vunpack.c.l.b16 %v29
  %v69 = vunpack.c.l.b16 %v30
  %v70 = vunpack.c.l.b16 %v31
  %v71 = vpack.c.b16 %v56, %v55
  %v72 = vpack.c.b16 %v58, %v57
  %v73 = vpack.c.b16 %v60, %v59
  %v74 = vpack.c.b16 %v62, %v61
  %v75 = vpack.c.b16 %v64, %v63
  %v76 = vpack.c.b16 %v66, %v65
  %v77 = vpack.c.b16 %v68, %v67
  %v78 = vpack.c.b16 %v70, %v69
  %87 = vmatprep.subr.bf16.mxu0 0
  %88 = vmatpush1.bf16.msra.mxu0 %v78
  %89 = vmatprep.subr.bf16.mxu0 0
  %90 = vmatpush1.bf16.msra.mxu0 %v77
  %91 = vmatprep.subr.bf16.mxu0 0
  %92 = vmatpush1.bf16.msra.mxu0 %v76
  %93 = vmatprep.subr.bf16.mxu0 0
  %94 = vmatpush1.bf16.msra.mxu0 %v75
  %95 = vmatprep.subr.bf16.mxu0 0
  %96 = vmatpush1.bf16.msra.mxu0 %v74
  %97 = vmatprep.subr.bf16.mxu0 0
  %98 = vmatpush1.bf16.msra.mxu0 %v73
  %99 = vmatprep.subr.bf16.mxu0 0
  %100 = vmatpush1.bf16.msra.mxu0 %v72
  %101 = vmatprep.subr.bf16.mxu0 0
  %102 = vmatpush1.bf16.msra.mxu0 %v71
  %103 = vmatprep.subr.bf16.mxu0 0
  %104 = vmatpush2.bf16.msra.mxu0 0
  %105 = vmatprep.subr.bf16.mxu0 0
  %106 = vmatpush2.bf16.msra.mxu0 0
  %107 = vmatprep.subr.bf16.mxu0 0
  %108 = vmatpush2.bf16.msra.mxu0 0
  %109 = vmatprep.subr.bf16.mxu0 0
  %110 = vmatpush2.bf16.msra.mxu0 0
  %111 = vmatprep.subr.bf16.mxu0 0
  %112 = vmatpush2.bf16.msra.mxu0 0
  %113 = vmatprep.subr.bf16.mxu0 0
  %114 = vmatpush2.bf16.msra.mxu0 0
  %115 = vmatprep.subr.bf16.mxu0 0
  %116 = vmatpush2.bf16.msra.mxu0 0
  %117 = vmatprep.subr.bf16.mxu0 0
  %118 = vmatpush2.bf16.msra.mxu0 0
  %119 = vmatprep.mubr.bf16.mxu0 0
  %120 = vmatmul.mubr.bf16.gmra.mxu0 %v15
  %v121 = vpop.f32.mrf.mxu0
  %v122 = vadd.f32 %v37, %v121
  %v123 = vpop.f32.mrf.mxu0
  %v124 = vpop.f32.mrf.mxu0
  %v125 = vpop.f32.mrf.mxu0
  %126 = vdwg.mxu0
  %v127 = vmax.f32 %v122, 0.0
  %128 = vst [vmem:[%s3] sm:$0xff] %v127
  // Predicated region
  $region14: #{simcat_forward.1} parent=0 // pred_check
    _
  $region15: #{simcat_forward.1} parent=0 // pred_check_branch
    %130 = sbr.rel (0) target = $region17
  $region16: #{simcat_forward.1} parent=0 // pred_region
    _
  $region17: #{simcat_forward.1} parent=0 // pred_fallthru
    _
  // Predicated region
  $region18: #{simcat_forward.1} parent=0 // pred_check
    _
  $region19: #{simcat_forward.1} parent=0 // pred_check_branch
    %132 = sbr.rel (0) target = $region21
  $region20: #{simcat_forward.1} parent=0 // pred_region
    _
  $region21: #{simcat_forward.1} parent=0 // pred_fallthru
    _

</llo_original>
